<compile_context>
chip_gen: v6e
topology: v6e:2x2x1
jax: 0.10.0
libtpu: 0.0.40
codegen_flags: <defaults>
</compile_context>

<pallas_src>
import functools

import jax
import jax.numpy as jnp
from jax import lax
from jax.experimental import pallas as pl
from jax.experimental.pallas import tpu as pltpu

_MIB = 1024 * 1024


def _round_up(x, m):
    return ((x + m - 1) // m) * m


def _sublane_multiple(dtype):
    # 8 for f32, 16 for bf16, 32 for 1-byte dtypes.
    return max(8, 32 // jnp.dtype(dtype).itemsize)


def _chip_profile():
    """Generation-tuned default tiles and a safe explicit VMEM ceiling."""
    kind = ""
    try:
        kind = jax.devices()[0].device_kind.lower()
    except Exception:
        pass
    if "v7" in kind:
        # v7x: 64 MiB physical VMEM per TC -> keep explicit limit well under it.
        return dict(tm=1024, tn=1024, tk=512, vmem_cap=56 * _MIB)
    if "v5" in kind:
        # v5e: 4x128x128 MXU, ~240 FLOP/B ridge; 128 MiB physical VMEM.
        return dict(tm=512, tn=512, tk=512, vmem_cap=96 * _MIB)
    if "v6" in kind:
        # v6e: ~670 FLOP/B ridge; 128 MiB physical VMEM.
        return dict(tm=1024, tn=2048, tk=512, vmem_cap=100 * _MIB)
    # Unknown chip: conservative tiles and ceiling.
    return dict(tm=512, tn=1024, tk=512, vmem_cap=56 * _MIB)


def _choose_tm(M, tm_req, sub):
    if M <= sub:
        return M                      # single (possibly ragged) block == full dim
    tm = min((tm_req // sub) * sub, (M // sub) * sub)
    return max(sub, tm)


def _choose_tn(N, tn_req):
    if N <= 128:
        return N                      # block == full dim (lane-exempt)
    tn = min((tn_req // 128) * 128, (N // 128) * 128)
    return max(128, tn)


def _choose_tk(K, tk_req):
    tk_req = max(128, (tk_req // 128) * 128)
    if K <= tk_req:
        return K                      # whole contraction in one MXU pass
    if K % 128 == 0:
        # Largest multiple of 128 <= tk_req that divides K -> no K padding needed.
        for cand in range(tk_req, 127, -128):
            if K % cand == 0:
                return cand
    return tk_req                     # caller zero-pads K


def _linear2d_kernel(*refs, has_k_grid, add_bias, use_acc):
    """Tiled Y = X @ W^T (+ optional bias) with f32 accumulation on the MXU.

    Ref layout: x_ref [tm,tk], w_ref [tn,tk], [b_ref [1,tn]], o_ref [tm,tn],
                [acc_ref [tm,tn] f32 scratch].
      - has_k_grid: grid has a 3rd (innermost, "arbitrary") reduction axis over K
      - add_bias  : fuse the bias add into the epilogue
      - use_acc   : accumulate in f32 VMEM scratch (only when o_ref is not f32)
    """
    idx = 0
    x_ref = refs[idx]; idx += 1
    w_ref = refs[idx]; idx += 1
    b_ref = None
    if add_bias:
        b_ref = refs[idx]; idx += 1
    o_ref = refs[idx]; idx += 1
    acc_ref = refs[idx] if use_acc else o_ref

    # Contract the last dim of both operands: x[tm,tk] . w[tn,tk]^T -> [tm,tn].
    dims = (((1,), (1,)), ((), ()))
    prod = lax.dot_general(x_ref[...], w_ref[...], dims,
                           preferred_element_type=jnp.float32)

    if not has_k_grid:
        # Whole K contraction in one pass; no accumulator, no pl.when.
        if add_bias:
            prod = prod + b_ref[...]
        o_ref[...] = prod.astype(o_ref.dtype)
        return

    # NOTE: correctness of accumulating directly into o_ref / acc_ref relies on
    # the output block index being constant over the innermost K axis, which is
    # marked "arbitrary" (the wrapper asserts this grid ordering).
    k = pl.program_id(2)

    @pl.when(k == 0)
    def _():
        acc_ref[...] = prod           # init with first product (no zero pass)

    @pl.when(k != 0)
    def _():
        acc_ref[...] += prod

    if use_acc or add_bias:
        @pl.when(k == pl.num_programs(2) - 1)
        def _():
            out = acc_ref[...]
            if add_bias:
                out = out + b_ref[...]
            o_ref[...] = out.astype(o_ref.dtype)


def parallel_linear_2d_forward(
    activation_input,
    weight,
    bias,
    *,
    skip_bias_add=True,
    tm=None,
    tn=None,
    tk=None,
):
    """Forward pass of ParallelLinear2D (tp_x = tp_y = 1).

    activation_input: [S, B, K]   (Megatron seq-first layout)
    weight          : [N, K]      (output_size_per_partition, input_size_per_partition)
    bias            : [N] or None
    Returns (output [S, B, N], output_bias).
    """
    S, B, Kin = activation_input.shape
    N, K = weight.shape
    assert Kin == K, "input hidden size must match weight input_size_per_partition"
    M = S * B
    out_dtype = activation_input.dtype

    x2d = activation_input.reshape(M, K)     # free (contiguous) reshape
    add_bias_in_kernel = (not skip_bias_add) and (bias is not None)

    prof = _chip_profile()
    tm = tm if tm is not None else prof["tm"]
    tn = tn if tn is not None else prof["tn"]
    tk = tk if tk is not None else prof["tk"]

    sub = _sublane_multiple(x2d.dtype)
    tm = _choose_tm(M, tm, sub)
    tn = _choose_tn(N, tn)
    tk = _choose_tk(K, tk)

    # v7x megacore: make sure at least one "parallel" grid axis has >= 2 blocks
    # (small-M decode shapes would otherwise idle one TensorCore).
    while (pl.cdiv(M, tm) * pl.cdiv(N, tn) < 2) and tn >= 256 and tn % 256 == 0:
        tn //= 2

    # Only the contraction dim is ever padded: OOB garbage along ragged M/N
    # blocks never lands in valid output, but garbage along K would contaminate.
    if K > tk and K % tk != 0:
        Kp = _round_up(K, tk)
        x2d = jnp.pad(x2d, ((0, 0), (0, Kp - K)))
        w = jnp.pad(weight, ((0, 0), (0, Kp - K)))
    else:
        Kp = K
        w = weight

    nk = pl.cdiv(Kp, tk)
    has_k_grid = nk > 1
    # Accumulate straight into the resident output tile when it is already f32.
    use_acc = has_k_grid and (jnp.dtype(out_dtype) != jnp.dtype(jnp.float32))

    gi, gj = pl.cdiv(M, tm), pl.cdiv(N, tn)

    args = [x2d, w]
    if has_k_grid:
        grid = (gi, gj, nk)                   # K MUST stay innermost (see kernel)
        in_specs = [
            pl.BlockSpec((tm, tk), lambda i, j, k: (i, k)),   # X [M, K]
            pl.BlockSpec((tn, tk), lambda i, j, k: (j, k)),   # W [N, K]
        ]
        if add_bias_in_kernel:
            in_specs.append(pl.BlockSpec((1, tn), lambda i, j, k: (0, j)))
        out_spec = pl.BlockSpec((tm, tn), lambda i, j, k: (i, j))
        dim_sem = ("parallel", "parallel", "arbitrary")
    else:
        grid = (gi, gj)
        in_specs = [
            pl.BlockSpec((tm, tk), lambda i, j: (i, 0)),
            pl.BlockSpec((tn, tk), lambda i, j: (j, 0)),
        ]
        if add_bias_in_kernel:
            in_specs.append(pl.BlockSpec((1, tn), lambda i, j: (0, j)))
        out_spec = pl.BlockSpec((tm, tn), lambda i, j: (i, j))
        dim_sem = ("parallel", "parallel")

    if add_bias_in_kernel:
        args.append(bias.astype(jnp.float32).reshape(1, N))

    scratch_shapes = [pltpu.VMEM((tm, tn), jnp.float32)] if use_acc else []

    # VMEM budget: 2 pipeline buffers per streamed operand and for the output
    # tile; accumulator scratch (if any) is single-buffered. Chip-aware cap.
    xb = jnp.dtype(x2d.dtype).itemsize
    wb = jnp.dtype(w.dtype).itemsize
    ob = jnp.dtype(out_dtype).itemsize
    need = 2 * tm * tk * xb + 2 * tn * tk * wb + 2 * tm * tn * ob
    if use_acc:
        need += tm * tn * 4
    if add_bias_in_kernel:
        need += 2 * tn * 4
    vmem_limit = int(min(prof["vmem_cap"], max(int(need * 1.3), 32 * _MIB)))

    cost = pl.CostEstimate(
        flops=2 * M * N * Kp,
        transcendentals=0,
        # X is re-read once per N-block, W once per M-block, output written once.
        bytes_accessed=M * Kp * xb * gj + N * Kp * wb * gi + M * N * ob,
    )

    out = pl.pallas_call(
        functools.partial(
            _linear2d_kernel,
            has_k_grid=has_k_grid,
            add_bias=add_bias_in_kernel,
            use_acc=use_acc,
        ),
        out_shape=jax.ShapeDtypeStruct((M, N), out_dtype),
        grid_spec=pltpu.PrefetchScalarGridSpec(
            num_scalar_prefetch=0,
            grid=grid,
            in_specs=in_specs,
            out_specs=out_spec,
            scratch_shapes=scratch_shapes,
        ),
        compiler_params=pltpu.CompilerParams(
            dimension_semantics=dim_sem,
            vmem_limit_bytes=vmem_limit,
        ),
        cost_estimate=cost,
    )(*args)

    matmul_output = out.reshape(S, B, N)

    if skip_bias_add:
        # Module default: bias returned to caller for later fusion.
        return matmul_output, bias
    return matmul_output, None


def init_parallel_linear_2d_params(key, input_size, output_size, add_bias=True,
                                   params_dtype=jnp.float32):
    """Deterministic stand-in for init_method (normal, std=0.02); bias zeroed."""
    # With tp_x = tp_y = 1, per-partition sizes equal global sizes.
    weight = (0.02 * jax.random.normal(
        key, (output_size, input_size))).astype(params_dtype)
    bias = jnp.zeros((output_size,), params_dtype) if add_bias else None
    return weight, bias


if __name__ == "__main__":
    # Small shapes consistent with the module: seq=8, batch=2,
    # input_size (hidden in) = 256, output_size (hidden out) = 320
    # (not a multiple of the N tile -> exercises ragged output blocks).
    S, B, IN_SIZE, OUT_SIZE = 8, 2, 256, 320

    key = jax.random.PRNGKey(0)
    kx, kw, kb = jax.random.split(key, 3)

    x = jax.random.normal(kx, (S, B, IN_SIZE), dtype=jnp.float32)
    weight, bias = init_parallel_linear_2d_params(kw, IN_SIZE, OUT_SIZE, add_bias=True)
    ref = jnp.einsum("sbk,nk->sbn", x, weight)

    # --- Path 1: module default (skip_bias_add=True), chip-default tiles,
    #             single-pass K, ragged N blocks. ---
    out, out_bias = parallel_linear_2d_forward(x, weight, bias, skip_bias_add=True)
    out = jax.block_until_ready(out)
    assert out.shape == (S, B, OUT_SIZE)
    assert out_bias is not None and out_bias.shape == (OUT_SIZE,)
    assert jnp.allclose(out, ref, atol=1e-4, rtol=1e-4), "mismatch vs reference (path 1)"

    # --- Path 2: fused bias, forced K-reduction grid (direct f32 accumulation
    #             into the resident output tile). ---
    bias_rand = (0.1 * jax.random.normal(kb, (OUT_SIZE,))).astype(jnp.float32)
    out2, ob2 = parallel_linear_2d_forward(
        x, weight, bias_rand, skip_bias_add=False, tm=16, tn=128, tk=128)
    out2 = jax.block_until_ready(out2)
    assert ob2 is None
    assert jnp.allclose(out2, ref + bias_rand, atol=1e-4, rtol=1e-4), \
        "mismatch vs reference (path 2)"

    # --- Path 3: bf16 inputs with f32 scratch accumulator over a K grid. ---
    x_bf = x.astype(jnp.bfloat16)
    w_bf = weight.astype(jnp.bfloat16)
    out3, _ = parallel_linear_2d_forward(
        x_bf, w_bf, None, skip_bias_add=True, tm=16, tn=128, tk=128)
    out3 = jax.block_until_ready(out3)
    ref3 = jnp.einsum("sbk,nk->sbn", x_bf.astype(jnp.float32), w_bf.astype(jnp.float32))
    assert out3.dtype == jnp.bfloat16
    assert jnp.allclose(out3.astype(jnp.float32), ref3, atol=3e-2, rtol=3e-2), \
        "mismatch vs reference (path 3)"

    print("KERNEL_OK")
</pallas_src>

<mosaic_0001>
module attributes {stable_mosaic.version = 11 : i64} {
  func.func @_linear2d_kernel(%arg0: i32, %arg1: i32, %arg2: memref<16x256xf32, #tpu.memory_space<vmem>>, %arg3: memref<256x256xf32, #tpu.memory_space<vmem>>, %arg4: memref<16x256xf32, #tpu.memory_space<vmem>>) attributes {dimension_semantics = [#tpu.dimension_semantics<parallel>, #tpu.dimension_semantics<parallel>], iteration_bounds = array<i64: 1, 2>, scalar_prefetch = 0 : i64, scratch_operands = 0 : i64, tpu.core_type = #tpu.core_type<tc>, window_params = [{transform_indices = @transform_0, window_bounds = array<i64: 16, 256>}, {transform_indices = @transform_1, window_bounds = array<i64: 256, 256>}, {transform_indices = @transform_2, window_bounds = array<i64: 16, 256>}]} {
    %c0 = arith.constant 0 : index
    %c0_0 = arith.constant 0 : index
    %0 = vector.load %arg2[%c0, %c0_0] : memref<16x256xf32, #tpu.memory_space<vmem>>, vector<16x256xf32>
    %c0_1 = arith.constant 0 : index
    %c0_2 = arith.constant 0 : index
    %1 = vector.load %arg3[%c0_1, %c0_2] : memref<256x256xf32, #tpu.memory_space<vmem>>, vector<256x256xf32>
    %cst = arith.constant dense<0.000000e+00> : vector<16x256xf32>
    %2 = tpu.matmul %0, %1, %cst {dimension_numbers = #tpu.dot_dimension_numbers<[1], [1], [0], [0], [0, 0, 1, 0], [], []>} : vector<16x256xf32>, vector<256x256xf32>, vector<16x256xf32> -> vector<16x256xf32>
    %c0_3 = arith.constant 0 : index
    %c0_4 = arith.constant 0 : index
    %3 = vector.load %arg4[%c0_3, %c0_4] : memref<16x256xf32, #tpu.memory_space<vmem>>, vector<16x256xf32>
    tpu.vector_store %arg4[%c0_3, %c0_4], %2 {strides = array<i32>} : memref<16x256xf32, #tpu.memory_space<vmem>>, vector<16x256xf32>,
    return
  }
  func.func @transform_0(%arg0: i32, %arg1: i32) -> (i32, i32) {
    %c0_i32 = arith.constant 0 : i32
    %c0_i32_0 = arith.constant 0 : i32
    return %arg0, %c0_i32 : i32, i32
  }
  func.func @transform_1(%arg0: i32, %arg1: i32) -> (i32, i32) {
    %c0_i32 = arith.constant 0 : i32
    %c0_i32_0 = arith.constant 0 : i32
    return %arg1, %c0_i32 : i32, i32
  }
  func.func @transform_2(%arg0: i32, %arg1: i32) -> (i32, i32) {
    %c0_i32 = arith.constant 0 : i32
    return %arg0, %arg1 : i32, i32
  }
}

</mosaic_0001>

<llo_original>
// kernel: tpu_custom_call.1
$region0: #{tpu_custom_call.1}
  #allocation0 [shape = 'u32[]', space=smem, size = 0x4, offset = 0x4, fixed_abs, tag = 'smem constant byte address 0x4 - core index']
  #allocation1 [shape = 'u32[144,128]{1,0:T(1,128)}', space=vmem, size = 0x12000, scoped, tag = 'internal scratch']
  %s0 = inlined_call_operand.hbm [shape: f32[16,256], index: 0, kind: input, shape index: {}]
  %s1 = inlined_call_operand.hbm [shape: f32[320,256], index: 1, kind: input, shape index: {}]
  %s2 = inlined_call_operand.hbm [shape: f32[16,320], index: 2, kind: output, shape index: {}]
  %s3 = sld [smem:[#allocation0]]
  $region49: #{tpu_custom_call.1} parent=0
    _
  %s5 = ssub.s32 1, %s3
  %s6 = scalar_select 0, %s5, %s3
  $region1: #{tpu_custom_call.1} parent=0
    #allocation2 [shape = 'u8[16384]{0}', space=vmem, size = 0x4000, scoped, tag = 'input window, operand 0, single buffered']
    #allocation3 [shape = 's32[2]{0}', space=sflag, size = 0x8, scoped, tag = 'scoped memory for tpu_custom_call.1']
    #allocation4 [shape = 's32[2]{0}', space=sflag, size = 0x8, scoped, tag = 'scoped memory for tpu_custom_call.1']
    #allocation5 [shape = 'u8[524288]{0}', space=vmem, size = 0x80000, scoped, tag = 'input window, operand 1']
    #allocation6 [shape = 's32[2]{0}', space=sflag, size = 0x8, scoped, tag = 'scoped memory for tpu_custom_call.1']
    #allocation7 [shape = 'u8[32768]{0}', space=vmem, size = 0x8000, scoped, tag = 'output window, operand 0']
    %7 = vsyncpa [#allocation3], 0
    %8 = vsyncpa [#allocation6], 0
    %s9 = scalar_lea.sflag [#allocation6], 1
    %10 = vsyncpa %s9, 0
    %11 = vsyncpa [#allocation4], 0
    %s12 = scalar_lea.sflag [#allocation4], 1
    %13 = vsyncpa %s12, 0
    loop: start=0, step=1, limit=4
    $region2: #{tpu_custom_call.1} parent=1 // loop_pre_header
      _
    $region3: #{tpu_custom_call.1} parent=1 // loop_header
      %s15 = sphi 0, %s19
      %p16 = scmp.ge.s32.totalorder %s15, 4
      %s22 = sphi 0, %s34
      %s23 = sphi 0, %s30
      %s24 = sphi 0, %s22
      %s25 = sphi 0, %s23
      %s26 = sphi 0, %s24
      %s27 = sphi 0, %s25
      %s37 = sphi 0, %s39
      %s40 = sphi 0, %s37
      %s41 = sphi 0, %s40
      %s57 = sphi 0, %s41
      %s63 = sphi 0, %s65
      %s66 = sphi 0, %s63
      %s67 = sphi 0, %s66
      %s83 = sphi 0, %s67
      %s91 = sphi 0, %s93
      %s94 = sphi 0, %s91
      %s95 = sphi 0, %s94
      %s111 = sphi 0, %s95
    $region4: #{tpu_custom_call.1} parent=1 // loop_header_branch
      %18 = sbr.rel (%p16) target = $region8
    $region5: #{tpu_custom_call.1} parent=1 // loop_body
      %s20 = ssub.s32 %s15, 1
      %s21 = ssub.s32 %s15, 2
      %s28 = sadd.s32 1, %s23
      %p29 = scmp.ge.s32.totalorder %s28, 2
      %s30 = scalar_select %p29, 0, %s28
      %s31 = sadd.s32 1, %s22
      %s32 = scalar_select %p29, %s31, %s22
      %p33 = scmp.ge.s32.totalorder %s32, 1
      %s34 = scalar_select %p33, 0, %s32
      %s35 = ssub.s32 %s22, %s34
      %p36 = scmp.eq.s32.totalorder %s35, 0
      %s38 = sadd.s32 %s37, 1
      %s39 = scalar_select %p36, %s37, %s38
      %p42 = pneg %p36
      %p43 = scmp.eq.s32.totalorder %s15, 1
      %p44 = por %p42, %p43
      %p45 = scmp.ne.s32.totalorder %s37, %s40
      %p46 = scmp.eq.s32.totalorder %s15, 0
      %p47 = por %p45, %p46
      %p48 = scmp.ne.s32.totalorder %s37, %s40
      %p49 = scmp.eq.s32.totalorder %s20, 1
      %p50 = por %p48, %p49
      %p51 = scmp.ne.s32.totalorder %s40, %s41
      %p52 = scmp.eq.s32.totalorder %s20, 0
      %p53 = por %p51, %p52
      %p54 = scmp.ne.s32.totalorder %s40, %s41
      %p55 = scmp.eq.s32.totalorder %s21, 1
      %p56 = por %p54, %p55
      %p58 = scmp.ne.s32.totalorder %s41, %s57
      %p59 = scmp.eq.s32.totalorder %s21, 0
      %p60 = por %p58, %p59
      %s61 = ssub.s32 %s23, %s30
      %p62 = scmp.eq.s32.totalorder %s61, 0
      %s64 = sadd.s32 %s63, 1
      %s65 = scalar_select %p62, %s63, %s64
      %p68 = pneg %p62
      %p69 = scmp.eq.s32.totalorder %s15, 1
      %p70 = por %p68, %p69
      %p71 = scmp.ne.s32.totalorder %s63, %s66
      %p72 = scmp.eq.s32.totalorder %s15, 0
      %p73 = por %p71, %p72
      %p74 = scmp.ne.s32.totalorder %s63, %s66
      %p75 = scmp.eq.s32.totalorder %s20, 1
      %p76 = por %p74, %p75
      %p77 = scmp.ne.s32.totalorder %s66, %s67
      %p78 = scmp.eq.s32.totalorder %s20, 0
      %p79 = por %p77, %p78
      %p80 = scmp.ne.s32.totalorder %s66, %s67
      %p81 = scmp.eq.s32.totalorder %s21, 1
      %p82 = por %p80, %p81
      %p84 = scmp.ne.s32.totalorder %s67, %s83
      %p85 = scmp.eq.s32.totalorder %s21, 0
      %p86 = por %p84, %p85
      %s87 = ssub.s32 %s22, %s34
      %s88 = ssub.s32 %s23, %s30
      %s89 = sor.u32 %s87, %s88
      %p90 = scmp.eq.s32.totalorder %s89, 0
      %s92 = sadd.s32 %s91, 1
      %s93 = scalar_select %p90, %s91, %s92
      %p96 = pneg %p90
      %p97 = scmp.eq.s32.totalorder %s15, 1
      %p98 = por %p96, %p97
      %p99 = scmp.ne.s32.totalorder %s91, %s94
      %p100 = scmp.eq.s32.totalorder %s15, 0
      %p101 = por %p99, %p100
      %p102 = scmp.ne.s32.totalorder %s91, %s94
      %p103 = scmp.eq.s32.totalorder %s20, 1
      %p104 = por %p102, %p103
      %p105 = scmp.ne.s32.totalorder %s94, %s95
      %p106 = scmp.eq.s32.totalorder %s20, 0
      %p107 = por %p105, %p106
      %p108 = scmp.ne.s32.totalorder %s94, %s95
      %p109 = scmp.eq.s32.totalorder %s21, 1
      %p110 = por %p108, %p109
      %p112 = scmp.ne.s32.totalorder %s95, %s111
      %p113 = scmp.eq.s32.totalorder %s21, 0
      %p114 = por %p112, %p113
      %p115 = scmp.le.s32.totalorder 1, %s15
      %p116 = scmp.lt.s32.totalorder %s15, 3
      %p117 = pnand %p115, %p116
      %p118 = pneg %p117
      // Predicated region
      $region9: #{tpu_custom_call.1} parent=5 // pred_check
        _
      $region10: #{tpu_custom_call.1} parent=5 // pred_check_branch
        %120 = sbr.rel (%p117) target = $region12
      $region11: #{tpu_custom_call.1} parent=5 // pred_region
        %s121 = ssub.s32 %s15, 1
        // Predicated region
        $region13: #{tpu_custom_call.1} parent=11 // pred_check
          %p122 = pneg %p53
        $region14: #{tpu_custom_call.1} parent=11 // pred_check_branch
          %124 = sbr.rel (%p122) target = $region16
        $region15: #{tpu_custom_call.1} parent=11 // pred_region
          %s125 = smul.u32 2, %s24
          %s127 = ssub.s32 512, 512
          %128 = vsyncadd [#allocation3], %s127
          %s129 = smul.addr %s125, 2
          %s130 = smul.addr %s129, 128
          %s131 = scalar_lea.hbm %s0, %s130
          %s132 = sshll.u32 [#allocation2], 4
          %s133 = int_to_ptr.vmem [resolvable:$true] %s132
          %138 = dma.hbm_to_vmem [thread:$0]  %s131, 512, %s133, [#allocation3], 256, 256, 16
        $region16: #{tpu_custom_call.1} parent=11 // pred_fallthru
          _
      $region12: #{tpu_custom_call.1} parent=5 // pred_fallthru
        _
      %p139 = scmp.lt.s32.totalorder %s15, 2
      // Predicated region
      $region17: #{tpu_custom_call.1} parent=5 // pred_check
        %p140 = pneg %p139
      $region18: #{tpu_custom_call.1} parent=5 // pred_check_branch
        %142 = sbr.rel (%p140) target = $region20
      $region19: #{tpu_custom_call.1} parent=5 // pred_region
        // Predicated region
        $region21: #{tpu_custom_call.1} parent=19 // pred_check
          %p143 = pneg %p73
        $region22: #{tpu_custom_call.1} parent=19 // pred_check_branch
          %145 = sbr.rel (%p143) target = $region24
        $region23: #{tpu_custom_call.1} parent=19 // pred_region
          %s146 = sand.u32 %s63, 1
          %s147 = scalar_lea.sflag [#allocation6], %s146
          %s148 = sand.u32 %s63, 1
          %s149 = smul.addr %s148, 512
          %s150 = scalar_lea.vmem [#allocation5], %s149
          %s151 = smul.u32 32, %s23
          %s152 = ssub.s32 40, %s151
          %p153 = scmp.lt.s32.totalorder %s152, 32
          %s154 = scalar_select %p153, %s152, 32
          %s155 = smul.u32 128, %s154
          %s156 = smul.u32 %s155, 2
          %s158 = ssub.s32 8192, %s156
          %159 = vsyncadd %s147, %s158
          %p160 = scmp.ne.s32.totalorder 0, %s156
          %s161 = smul.addr %s151, 2
          %s162 = smul.addr %s161, 128
          %s163 = scalar_lea.hbm %s1, %s162
          %s164 = smul.u32 16, %s154
          %s165 = sshll.u32 %s150, 4
          %s166 = int_to_ptr.vmem [resolvable:$true] %s165
          %s167 = sshll.u32 %s164, 4
          %171 = dma.hbm_to_vmem [thread:$0]  (%p160), %s163, %s167, %s166, %s147, 256, 256, 16
        $region24: #{tpu_custom_call.1} parent=19 // pred_fallthru
          _
      $region20: #{tpu_custom_call.1} parent=5 // pred_fallthru
        _
      %p172 = scmp.le.s32.totalorder 1, %s15
      %p173 = scmp.lt.s32.totalorder %s15, 3
      %p174 = pnand %p172, %p173
      %p175 = pneg %p174
      // Predicated region
      $region25: #{tpu_custom_call.1} parent=5 // pred_check
        _
      $region26: #{tpu_custom_call.1} parent=5 // pred_check_branch
        %177 = sbr.rel (%p174) target = $region28
      $region27: #{tpu_custom_call.1} parent=5 // pred_region
        %s178 = ssub.s32 %s15, 1
        // Predicated region
        $region29: #{tpu_custom_call.1} parent=27 // pred_check
          %p179 = pneg %p53
        $region30: #{tpu_custom_call.1} parent=27 // pred_check_branch
          %181 = sbr.rel (%p179) target = $region32
        $region31: #{tpu_custom_call.1} parent=27 // pred_region
          %182 = dma.done [#allocation3], 512
        $region32: #{tpu_custom_call.1} parent=27 // pred_fallthru
          _
        %s183 = sand.u32 %s66, 1
        %s184 = scalar_lea.sflag [#allocation6], %s183
        %s185 = sand.u32 %s66, 1
        %s186 = smul.addr %s185, 512
        %s187 = scalar_lea.vmem [#allocation5], %s186
        // Predicated region
        $region33: #{tpu_custom_call.1} parent=27 // pred_check
          %p188 = pneg %p79
        $region34: #{tpu_custom_call.1} parent=27 // pred_check_branch
          %190 = sbr.rel (%p188) target = $region36
        $region35: #{tpu_custom_call.1} parent=27 // pred_region
          %191 = dma.done %s184, 8192
        $region36: #{tpu_custom_call.1} parent=27 // pred_fallthru
          _
        %p192 = pneg %p53
        %p193 = pneg %p50
        %s194 = sand.u32 %s66, 1
        %s195 = scalar_lea.sflag [#allocation6], %s194
        %s196 = sand.u32 %s66, 1
        %s197 = smul.addr %s196, 512
        %s198 = scalar_lea.vmem [#allocation5], %s197
        %p199 = pneg %p79
        %p200 = pneg %p76
        %p201 = pneg %p107
        %p202 = pneg %p104
        %s203 = sand.u32 %s94, 1
        %s204 = scalar_lea.sflag [#allocation4], %s203
        %s205 = sand.u32 %s94, 1
        %s206 = smul.addr %s205, 32
        %s207 = scalar_lea.vmem [#allocation7], %s206
        %s208 = smul.u32 2, %s24
        %s209 = smul.u32 32, %s25
        %s210 = ssub.s32 40, %s209
        %p211 = scmp.lt.s32.totalorder %s210, 32
        %s212 = scalar_select %p211, %s210, 32
        %s213 = smul.u32 128, %s212
        %s214 = smul.u32 %s213, 2
        %s215 = smul.u32 2, %s24
        %s216 = smul.u32 2, %s25
        %s217 = ssub.s32 3, %s216
        %p218 = scmp.lt.s32.totalorder %s217, 2
        %s219 = scalar_select %p218, %s217, 2
        %s220 = smul.u32 256, %s219
        %v221 = vld [vmem:[#allocation2] sm:$0xff]
        %v222 = vld [vmem:[#allocation2 + $0x8] sm:$0xff]
        %v223 = vld [vmem:[#allocation2 + $0x10] sm:$0xff]
        %v224 = vld [vmem:[#allocation2 + $0x18] sm:$0xff]
        %v225 = vld [vmem:[%s187] sm:$0xff]
        %v226 = vld [vmem:[%s187 + $0x8] sm:$0xff]
        %v227 = vld [vmem:[%s187 + $0x10] sm:$0xff]
        %v228 = vld [vmem:[%s187 + $0x18] sm:$0xff]
        %v229 = vld [vmem:[%s187 + $0x20] sm:$0xff]
        %v230 = vld [vmem:[%s187 + $0x28] sm:$0xff]
        %v231 = vld [vmem:[%s187 + $0x30] sm:$0xff]
        %v232 = vld [vmem:[%s187 + $0x38] sm:$0xff]
        %v233 = vld [vmem:[%s187 + $0x40] sm:$0xff]
        %v234 = vld [vmem:[%s187 + $0x48] sm:$0xff]
        %v235 = vld [vmem:[%s187 + $0x50] sm:$0xff]
        %v236 = vld [vmem:[%s187 + $0x58] sm:$0xff]
        %v237 = vld [vmem:[%s187 + $0x60] sm:$0xff]
        %v238 = vld [vmem:[%s187 + $0x68] sm:$0xff]
        %v239 = vld [vmem:[%s187 + $0x70] sm:$0xff]
        %v240 = vld [vmem:[%s187 + $0x78] sm:$0xff]
        %v241 = vld [vmem:[%s187 + $0x80] sm:$0xff]
        %v242 = vld [vmem:[%s187 + $0x88] sm:$0xff]
        %v243 = vld [vmem:[%s187 + $0x90] sm:$0xff]
        %v244 = vld [vmem:[%s187 + $0x98] sm:$0xff]
        %v245 = vld [vmem:[%s187 + $0xa0] sm:$0xff]
        %v246 = vld [vmem:[%s187 + $0xa8] sm:$0xff]
        %v247 = vld [vmem:[%s187 + $0xb0] sm:$0xff]
        %v248 = vld [vmem:[%s187 + $0xb8] sm:$0xff]
        %v249 = vld [vmem:[%s187 + $0xc0] sm:$0xff]
        %v250 = vld [vmem:[%s187 + $0xc8] sm:$0xff]
        %v251 = vld [vmem:[%s187 + $0xd0] sm:$0xff]
        %v252 = vld [vmem:[%s187 + $0xd8] sm:$0xff]
        %v253 = vld [vmem:[%s187 + $0xe0] sm:$0xff]
        %v254 = vld [vmem:[%s187 + $0xe8] sm:$0xff]
        %v255 = vld [vmem:[%s187 + $0xf0] sm:$0xff]
        %v256 = vld [vmem:[%s187 + $0xf8] sm:$0xff]
        %v257 = vld [vmem:[%s187 + $0x100] sm:$0xff]
        %v258 = vld [vmem:[%s187 + $0x108] sm:$0xff]
        %v259 = vld [vmem:[%s187 + $0x110] sm:$0xff]
        %v260 = vld [vmem:[%s187 + $0x118] sm:$0xff]
        %v261 = vld [vmem:[%s187 + $0x120] sm:$0xff]
        %v262 = vld [vmem:[%s187 + $0x128] sm:$0xff]
        %v263 = vld [vmem:[%s187 + $0x130] sm:$0xff]
        %v264 = vld [vmem:[%s187 + $0x138] sm:$0xff]
        %v265 = vld [vmem:[%s187 + $0x140] sm:$0xff]
        %v266 = vld [vmem:[%s187 + $0x148] sm:$0xff]
        %v267 = vld [vmem:[%s187 + $0x150] sm:$0xff]
        %v268 = vld [vmem:[%s187 + $0x158] sm:$0xff]
        %v269 = vld [vmem:[%s187 + $0x160] sm:$0xff]
        %v270 = vld [vmem:[%s187 + $0x168] sm:$0xff]
        %v271 = vld [vmem:[%s187 + $0x170] sm:$0xff]
        %v272 = vld [vmem:[%s187 + $0x178] sm:$0xff]
        %v273 = vld [vmem:[%s187 + $0x180] sm:$0xff]
        %v274 = vld [vmem:[%s187 + $0x188] sm:$0xff]
        %v275 = vld [vmem:[%s187 + $0x190] sm:$0xff]
        %v276 = vld [vmem:[%s187 + $0x198] sm:$0xff]
        %v277 = vld [vmem:[%s187 + $0x1a0] sm:$0xff]
        %v278 = vld [vmem:[%s187 + $0x1a8] sm:$0xff]
        %v279 = vld [vmem:[%s187 + $0x1b0] sm:$0xff]
        %v280 = vld [vmem:[%s187 + $0x1b8] sm:$0xff]
        %v281 = vld [vmem:[%s187 + $0x1c0] sm:$0xff]
        %v282 = vld [vmem:[%s187 + $0x1c8] sm:$0xff]
        %v283 = vld [vmem:[%s187 + $0x1d0] sm:$0xff]
        %v284 = vld [vmem:[%s187 + $0x1d8] sm:$0xff]
        %v285 = vld [vmem:[%s187 + $0x1e0] sm:$0xff]
        %v286 = vld [vmem:[%s187 + $0x1e8] sm:$0xff]
        %v287 = vld [vmem:[%s187 + $0x1f0] sm:$0xff]
        %v288 = vld [vmem:[%s187 + $0x1f8] sm:$0xff]
        %289 = vmatprep.subr.mxu0 %v256
        %290 = vmatpush1.xpose.msra.mxu0 %v255
        %291 = vmatprep.subr.mxu0 %v254
        %292 = vmatpush1.xpose.msra.mxu0 %v253
        %293 = vmatprep.subr.mxu0 %v252
        %294 = vmatpush1.xpose.msra.mxu0 %v251
        %295 = vmatprep.subr.mxu0 %v250
        %296 = vmatpush1.xpose.msra.mxu0 %v249
        %297 = vmatprep.subr.mxu0 %v248
        %298 = vmatpush1.xpose.msra.mxu0 %v247
        %299 = vmatprep.subr.mxu0 %v246
        %300 = vmatpush1.xpose.msra.mxu0 %v245
        %301 = vmatprep.subr.mxu0 %v244
        %302 = vmatpush1.xpose.msra.mxu0 %v243
        %303 = vmatprep.subr.mxu0 %v242
        %304 = vmatpush1.xpose.msra.mxu0 %v241
        %305 = vmatprep.subr.mxu0 %v240
        %306 = vmatpush1.xpose.msra.mxu0 %v239
        %307 = vmatprep.subr.mxu0 %v238
        %308 = vmatpush1.xpose.msra.mxu0 %v237
        %309 = vmatprep.subr.mxu0 %v236
        %310 = vmatpush1.xpose.msra.mxu0 %v235
        %311 = vmatprep.subr.mxu0 %v234
        %312 = vmatpush1.xpose.msra.mxu0 %v233
        %313 = vmatprep.subr.mxu0 %v232
        %314 = vmatpush1.xpose.msra.mxu0 %v231
        %315 = vmatprep.subr.mxu0 %v230
        %316 = vmatpush1.xpose.msra.mxu0 %v229
        %317 = vmatprep.subr.mxu0 %v228
        %318 = vmatpush1.xpose.msra.mxu0 %v227
        %319 = vmatprep.subr.mxu0 %v226
        %320 = vmatpush1.xpose.msra.mxu0 %v225
        %321 = vmatprep.subr.mxu0 %v288
        %322 = vmatpush2.xpose.msra.mxu0 %v287
        %323 = vmatprep.subr.mxu0 %v286
        %324 = vmatpush2.xpose.msra.mxu0 %v285
        %325 = vmatprep.subr.mxu0 %v284
        %326 = vmatpush2.xpose.msra.mxu0 %v283
        %327 = vmatprep.subr.mxu0 %v282
        %328 = vmatpush2.xpose.msra.mxu0 %v281
        %329 = vmatprep.subr.mxu0 %v280
        %330 = vmatpush2.xpose.msra.mxu0 %v279
        %331 = vmatprep.subr.mxu0 %v278
        %332 = vmatpush2.xpose.msra.mxu0 %v277
        %333 = vmatprep.subr.mxu0 %v276
        %334 = vmatpush2.xpose.msra.mxu0 %v275
        %335 = vmatprep.subr.mxu0 %v274
        %336 = vmatpush2.xpose.msra.mxu0 %v273
        %337 = vmatprep.subr.mxu0 %v272
        %338 = vmatpush2.xpose.msra.mxu0 %v271
        %339 = vmatprep.subr.mxu0 %v270
        %340 = vmatpush2.xpose.msra.mxu0 %v269
        %341 = vmatprep.subr.mxu0 %v268
        %342 = vmatpush2.xpose.msra.mxu0 %v267
        %343 = vmatprep.subr.mxu0 %v266
        %344 = vmatpush2.xpose.msra.mxu0 %v265
        %345 = vmatprep.subr.mxu0 %v264
        %346 = vmatpush2.xpose.msra.mxu0 %v263
        %347 = vmatprep.subr.mxu0 %v262
        %348 = vmatpush2.xpose.msra.mxu0 %v261
        %349 = vmatprep.subr.mxu0 %v260
        %350 = vmatpush2.xpose.msra.mxu0 %v259
        %351 = vmatprep.subr.mxu0 %v258
        %352 = vmatpush2.xpose.msra.mxu0 %v257
        %353 = vmatprep.mubr.f32.mxu0 %v222
        %354 = vmatmul.mubr.f32.gmra.mxu0 %v221
        %v355 = vpop.f32.mrf.mxu0
        %v356 = vadd.f32 0.0, %v355
        %v357 = vpop.f32.mrf.mxu0
        %v358 = vadd.f32 0.0, %v357
        %359 = vmatprep.mubr.f32.mxu0 %v224
        %360 = vmatmul.mubr.f32.gmra.mxu0 %v223
        %v361 = vpop.f32.mrf.mxu0
        %v362 = vadd.f32 0.0, %v361
        %v363 = vpop.f32.mrf.mxu0
        %v364 = vadd.f32 0.0, %v363
        %365 = vdwg.mxu0
        %366 = vst [vmem:[%s207] sm:$0xff] %v356
        %367 = vst [vmem:[%s207 + $0x8] sm:$0xff] %v358
        %368 = vst [vmem:[%s207 + $0x10] sm:$0xff] %v362
        %369 = vst [vmem:[%s207 + $0x18] sm:$0xff] %v364
        %s370 = sand.u32 %s94, 1
        %s371 = scalar_lea.sflag [#allocation4], %s370
        %s372 = sand.u32 %s94, 1
        %s373 = smul.addr %s372, 32
        %s374 = scalar_lea.vmem [#allocation7], %s373
        // Predicated region
        $region37: #{tpu_custom_call.1} parent=27 // pred_check
          %p375 = pneg %p104
        $region38: #{tpu_custom_call.1} parent=27 // pred_check_branch
          %377 = sbr.rel (%p375) target = $region40
        $region39: #{tpu_custom_call.1} parent=27 // pred_region
          %s378 = smul.u32 2, %s24
          %s379 = smul.u32 2, %s25
          %s380 = ssub.s32 3, %s379
          %p381 = scmp.lt.s32.totalorder %s380, 2
          %s382 = scalar_select %p381, %s380, 2
          %s383 = smul.u32 256, %s382
          %s385 = ssub.s32 512, %s383
          %386 = vsyncadd %s371, %s385
          %p387 = scmp.ne.s32.totalorder 0, %s383
          %s388 = smul.addr %s378, 3
          %s389 = sadd.s32 %s379, %s388
          %s390 = smul.addr %s389, 128
          %s391 = scalar_lea.hbm %s2, %s390
          %s392 = smul.u32 %s382, 8
          %s393 = smul.u32 %s392, 2
          %s394 = sshll.u32 %s374, 4
          %s395 = int_to_ptr.vmem [resolvable:$true] %s394
          %s396 = sshll.u32 %s393, 4
          %400 = dma.vmem_to_hbm [thread:$0]  (%p387), %s395, %s396, %s391, %s371, 256, 384, %s392
        $region40: #{tpu_custom_call.1} parent=27 // pred_fallthru
          _
      $region28: #{tpu_custom_call.1} parent=5 // pred_fallthru
        _
      %p401 = scmp.le.s32.totalorder 2, %s15
      // Predicated region
      $region41: #{tpu_custom_call.1} parent=5 // pred_check
        %p402 = pneg %p401
      $region42: #{tpu_custom_call.1} parent=5 // pred_check_branch
        %404 = sbr.rel (%p402) target = $region44
      $region43: #{tpu_custom_call.1} parent=5 // pred_region
        %s405 = ssub.s32 %s15, 2
        // Predicated region
        $region45: #{tpu_custom_call.1} parent=43 // pred_check
          %p406 = pneg %p110
        $region46: #{tpu_custom_call.1} parent=43 // pred_check_branch
          %408 = sbr.rel (%p406) target = $region48
        $region47: #{tpu_custom_call.1} parent=43 // pred_region
          %s409 = sand.u32 %s95, 1
          %s410 = scalar_lea.sflag [#allocation4], %s409
          %s411 = sand.u32 %s95, 1
          %s412 = smul.addr %s411, 32
          %s413 = scalar_lea.vmem [#allocation7], %s412
          %414 = dma.done %s410, 512
        $region48: #{tpu_custom_call.1} parent=43 // pred_fallthru
          _
      $region44: #{tpu_custom_call.1} parent=5 // pred_fallthru
        _
    $region6: #{tpu_custom_call.1} parent=1 // loop_footer
      %s19 = sadd.s32 1, %s15
    $region7: #{tpu_custom_call.1} parent=1 // loop_footer_branch
      %14 = sbr.rel target = $region3
    $region8: #{tpu_custom_call.1} parent=1 // loop_exit
      _
    %415 = vsyncpa [#allocation3], 1
    %s416 = scalar_lea.sflag [#allocation3], 1
    %417 = vsyncpa %s416, 1
    %418 = vsyncpa [#allocation6], 1
    %s419 = scalar_lea.sflag [#allocation6], 1
    %420 = vsyncpa %s419, 1
    %421 = vsyncpa [#allocation4], 1
    %s422 = scalar_lea.sflag [#allocation4], 1
    %423 = vsyncpa %s422, 1

</llo_original>
